<compile_context>
chip_gen: v5e
topology: v5e:2x2
jax: 0.10.0
libtpu: 0.0.40
codegen_flags: <defaults>
</compile_context>

<pallas_src>
import functools

import jax
import jax.numpy as jnp
from jax import lax
from jax.experimental import pallas as pl
from jax.experimental.pallas import tpu as pltpu


def _round_up(x, m):
    return ((x + m - 1) // m) * m


def _contrastive_loss_kernel(zi_ref, zj_ref, out_ref, *, inv_temp, b_valid, tq,
                             matmul_dtype):
    eps = 1e-12  # torch F.normalize default eps
    b_pad = zj_ref.shape[0]

    zi = zi_ref[...]          # (TQ, Dp) f32 query-row tile
    zj = zj_ref[...]          # (Bp, Dp) f32, resident across the whole grid

    # --- L2 normalize (rsqrt on EUP); fold 1/temperature into zi's scale. ---
    # F.normalize: x / max(||x||, eps) == x * rsqrt(max(sum(x^2), eps^2))
    zi_scale = lax.rsqrt(jnp.maximum(jnp.sum(zi * zi, axis=1, keepdims=True),
                                     eps * eps)) * inv_temp
    zj_scale = lax.rsqrt(jnp.maximum(jnp.sum(zj * zj, axis=1, keepdims=True),
                                     eps * eps))
    zi_n = zi * zi_scale      # carries the 1/temperature factor
    zj_n = zj * zj_scale

    # --- logits on the MXU: contract feature dim of both operands (no zj.T). --
    sim = lax.dot_general(
        zi_n.astype(matmul_dtype), zj_n.astype(matmul_dtype),
        dimension_numbers=(((1,), (1,)), ((), ())),
        preferred_element_type=jnp.float32)          # (TQ, Bp), already / temp

    # Mask padded key columns (zero-padded zj rows) out of the softmax.
    if b_pad > b_valid:
        col = lax.broadcasted_iota(jnp.int32, sim.shape, 1)
        sim = jnp.where(col < b_valid, sim, -1e30)

    # --- diagonal (the "label" logit) from (TQ, D) row dot-products. ---------
    tile_start = pl.multiple_of(pl.program_id(0) * tq, tq)
    zj_d = zj_ref[pl.ds(tile_start, tq), :]          # rows matching this tile
    zj_d_n = zj_d * lax.rsqrt(jnp.maximum(
        jnp.sum(zj_d * zj_d, axis=1, keepdims=True), eps * eps))
    diag = jnp.sum(zi_n * zj_d_n, axis=1, keepdims=True)   # (TQ, 1), has 1/temp

    # --- cross entropy with labels = arange(B): lse(row) - diag --------------
    row_max = jnp.max(sim, axis=1, keepdims=True)
    lse = row_max + jnp.log(jnp.sum(jnp.exp(sim - row_max), axis=1,
                                    keepdims=True))
    per_row = lse - diag                             # (TQ, 1)

    # Zero out contributions from padded query rows.
    if b_pad > b_valid:
        row_g = tile_start + lax.broadcasted_iota(jnp.int32, (tq, 1), 0)
        per_row = jnp.where(row_g < b_valid, per_row, 0.0)

    partial = jnp.sum(per_row)                       # scalar partial sum
    # Lane-dense per-tile output block; wrapper reduces and divides by B.
    out_ref[...] = jnp.full((1, 8, 128), partial, dtype=jnp.float32)


def contrastive_loss(z_i, z_j, temperature=0.1, *, matmul_dtype=jnp.bfloat16,
                     tq_max=256):
    """Pallas TPU implementation of ContrastiveLoss.forward. Returns a scalar."""
    assert z_i.shape == z_j.shape and z_i.ndim == 2
    b, d = z_i.shape

    # Pad feature dim to a lane multiple (exact: zero features change nothing)
    # and batch dim to a multiple of the row tile (masked inside the kernel).
    d_pad = _round_up(max(d, 128), 128)
    if b <= tq_max:
        tq = _round_up(b, 8)
        b_pad = tq
    else:
        tq = tq_max
        b_pad = _round_up(b, tq)
    num_tiles = b_pad // tq

    zi_p = jnp.pad(z_i.astype(jnp.float32), ((0, b_pad - b), (0, d_pad - d)))
    zj_p = jnp.pad(z_j.astype(jnp.float32), ((0, b_pad - b), (0, d_pad - d)))

    # Explicit VMEM budget: resident zj + double-buffered zi tiles + sim/exp
    # temporaries, clamped under v7x's 64 MiB physical VMEM.
    # Note: zj is kept fully VMEM-resident; for very large B*D a further
    # key-axis tiling pass (online softmax over key blocks) would be needed.
    vmem_est = 4 * (2 * b_pad * d_pad + 2 * tq * d_pad + 2 * 8 * 128
                    + 4 * tq * b_pad + 4 * tq * d_pad)
    vmem_limit = int(min(max(2 * vmem_est, 32 * 2**20), 56 * 2**20))

    kernel = functools.partial(
        _contrastive_loss_kernel,
        inv_temp=1.0 / float(temperature),
        b_valid=b, tq=tq, matmul_dtype=matmul_dtype)

    partials = pl.pallas_call(
        kernel,
        out_shape=jax.ShapeDtypeStruct((num_tiles, 8, 128), jnp.float32),
        grid=(num_tiles,),
        in_specs=[
            pl.BlockSpec((tq, d_pad), lambda i: (i, 0)),       # zi row tile
            pl.BlockSpec((b_pad, d_pad), lambda i: (0, 0)),    # zj resident
        ],
        out_specs=pl.BlockSpec((1, 8, 128), lambda i: (i, 0, 0)),
        compiler_params=pltpu.CompilerParams(
            dimension_semantics=("parallel",),
            vmem_limit_bytes=vmem_limit,
        ),
    )(zi_p, zj_p)

    return jnp.sum(partials[:, 0, 0]) / b


if __name__ == "__main__":
    # Small deterministic inputs: batch=8, feature dim=32 (projection outputs).
    key = jax.random.PRNGKey(0)
    k1, k2 = jax.random.split(key)
    B, D = 8, 32
    z_i = jax.random.normal(k1, (B, D), dtype=jnp.float32)
    z_j = jax.random.normal(k2, (B, D), dtype=jnp.float32)

    # Default path: bf16 MXU matmul with f32 accumulation (v6e/v7x full rate).
    loss_bf16 = contrastive_loss(z_i, z_j, temperature=0.1)
    jax.block_until_ready(loss_bf16)

    # f32-matmul path for a tight numerical check.
    loss_f32 = contrastive_loss(z_i, z_j, temperature=0.1,
                                matmul_dtype=jnp.float32)
    jax.block_until_ready(loss_f32)

    # Pure-JAX reference (same math as the PyTorch module, all f32).
    def ref(zi, zj, t=0.1):
        zi = zi / jnp.maximum(jnp.linalg.norm(zi, axis=1, keepdims=True), 1e-12)
        zj = zj / jnp.maximum(jnp.linalg.norm(zj, axis=1, keepdims=True), 1e-12)
        sim = (zi @ zj.T) / t
        lse = jax.scipy.special.logsumexp(sim, axis=1)
        return jnp.mean(lse - jnp.diag(sim))

    ref_loss = ref(z_i, z_j)
    assert jnp.allclose(loss_f32, ref_loss, rtol=1e-4, atol=1e-4), \
        (loss_f32, ref_loss)
    assert jnp.allclose(loss_bf16, ref_loss, rtol=0.0, atol=5e-2), \
        (loss_bf16, ref_loss)

    print("KERNEL_OK")
</pallas_src>

<mosaic_0001>
module attributes {stable_mosaic.version = 11 : i64} {
  func.func @_contrastive_loss_kernel(%arg0: i32, %arg1: memref<8x128xf32, #tpu.memory_space<vmem>>, %arg2: memref<8x128xf32, #tpu.memory_space<vmem>>, %arg3: memref<1x8x128xf32, #tpu.memory_space<vmem>>) attributes {dimension_semantics = [#tpu.dimension_semantics<parallel>], iteration_bounds = array<i64: 1>, scalar_prefetch = 0 : i64, scratch_operands = 0 : i64, tpu.core_type = #tpu.core_type<tc>, window_params = [{transform_indices = @transform_0, window_bounds = array<i64: 8, 128>}, {pipeline_mode = #tpu.pipeline_mode<synchronous>, transform_indices = @transform_1, window_bounds = array<i64: 8, 128>}, {transform_indices = @transform_2, window_bounds = array<i64: 1, 8, 128>}]} {
    %c0 = arith.constant 0 : index
    %c0_0 = arith.constant 0 : index
    %0 = vector.load %arg1[%c0, %c0_0] : memref<8x128xf32, #tpu.memory_space<vmem>>, vector<8x128xf32>
    %c0_1 = arith.constant 0 : index
    %c0_2 = arith.constant 0 : index
    %1 = vector.load %arg2[%c0_1, %c0_2] : memref<8x128xf32, #tpu.memory_space<vmem>>, vector<8x128xf32>
    %2 = arith.mulf %0, %0 : vector<8x128xf32>
    %cst = arith.constant dense<0.000000e+00> : vector<8xf32>
    %3 = vector.multi_reduction <add>, %2, %cst [1] : vector<8x128xf32> to vector<8xf32>
    %4 = vector.shape_cast %3 : vector<8xf32> to vector<8x1xf32>
    %cst_3 = arith.constant 1.000000e-24 : f32
    %5 = vector.broadcast %cst_3 : f32 to vector<8x1xf32>
    %6 = arith.maximumf %4, %5 : vector<8x1xf32>
    %7 = math.rsqrt %6 : vector<8x1xf32>
    %cst_4 = arith.constant 1.000000e+01 : f32
    %8 = vector.broadcast %cst_4 : f32 to vector<8x1xf32>
    %9 = arith.mulf %7, %8 : vector<8x1xf32>
    %10 = arith.mulf %1, %1 : vector<8x128xf32>
    %cst_5 = arith.constant dense<0.000000e+00> : vector<8xf32>
    %11 = vector.multi_reduction <add>, %10, %cst_5 [1] : vector<8x128xf32> to vector<8xf32>
    %12 = vector.shape_cast %11 : vector<8xf32> to vector<8x1xf32>
    %cst_6 = arith.constant 1.000000e-24 : f32
    %13 = vector.broadcast %cst_6 : f32 to vector<8x1xf32>
    %14 = arith.maximumf %12, %13 : vector<8x1xf32>
    %15 = math.rsqrt %14 : vector<8x1xf32>
    %16 = vector.broadcast %9 : vector<8x1xf32> to vector<8x128xf32>
    %17 = arith.mulf %0, %16 : vector<8x128xf32>
    %18 = vector.broadcast %15 : vector<8x1xf32> to vector<8x128xf32>
    %19 = arith.mulf %1, %18 : vector<8x128xf32>
    %20 = arith.truncf %17 : vector<8x128xf32> to vector<8x128xbf16>
    %21 = arith.truncf %19 : vector<8x128xf32> to vector<8x128xbf16>
    %cst_7 = arith.constant dense<0.000000e+00> : vector<8x8xf32>
    %22 = tpu.matmul %20, %21, %cst_7 {dimension_numbers = #tpu.dot_dimension_numbers<[1], [1], [0], [0], [0, 0, 1, 0], [], []>} : vector<8x128xbf16>, vector<8x128xbf16>, vector<8x8xf32> -> vector<8x8xf32>
    %c8_i32 = arith.constant 8 : i32
    %23 = arith.muli %arg0, %c8_i32 : i32
    %24 = tpu.assume_multiple %23, 8 : i32
    %25 = arith.index_cast %24 : i32 to index
    %c0_8 = arith.constant 0 : index
    %26 = vector.load %arg2[%25, %c0_8] : memref<8x128xf32, #tpu.memory_space<vmem>>, vector<8x128xf32>
    %27 = arith.mulf %26, %26 : vector<8x128xf32>
    %cst_9 = arith.constant dense<0.000000e+00> : vector<8xf32>
    %28 = vector.multi_reduction <add>, %27, %cst_9 [1] : vector<8x128xf32> to vector<8xf32>
    %29 = vector.shape_cast %28 : vector<8xf32> to vector<8x1xf32>
    %cst_10 = arith.constant 1.000000e-24 : f32
    %30 = vector.broadcast %cst_10 : f32 to vector<8x1xf32>
    %31 = arith.maximumf %29, %30 : vector<8x1xf32>
    %32 = math.rsqrt %31 : vector<8x1xf32>
    %33 = vector.broadcast %32 : vector<8x1xf32> to vector<8x128xf32>
    %34 = arith.mulf %26, %33 : vector<8x128xf32>
    %35 = arith.mulf %17, %34 : vector<8x128xf32>
    %cst_11 = arith.constant dense<0.000000e+00> : vector<8xf32>
    %36 = vector.multi_reduction <add>, %35, %cst_11 [1] : vector<8x128xf32> to vector<8xf32>
    %37 = vector.shape_cast %36 : vector<8xf32> to vector<8x1xf32>
    %cst_12 = arith.constant dense<0xFF800000> : vector<8xf32>
    %38 = vector.multi_reduction <maximumf>, %22, %cst_12 [1] : vector<8x8xf32> to vector<8xf32>
    %39 = vector.shape_cast %38 : vector<8xf32> to vector<8x1xf32>
    %40 = vector.broadcast %39 : vector<8x1xf32> to vector<8x8xf32>
    %41 = arith.subf %22, %40 : vector<8x8xf32>
    %42 = math.exp %41 : vector<8x8xf32>
    %cst_13 = arith.constant dense<0.000000e+00> : vector<8xf32>
    %43 = vector.multi_reduction <add>, %42, %cst_13 [1] : vector<8x8xf32> to vector<8xf32>
    %44 = vector.shape_cast %43 : vector<8xf32> to vector<8x1xf32>
    %45 = math.log %44 : vector<8x1xf32>
    %46 = arith.addf %39, %45 : vector<8x1xf32>
    %47 = arith.subf %46, %37 : vector<8x1xf32>
    %48 = vector.shape_cast %47 : vector<8x1xf32> to vector<1x8x1xf32>
    %cst_14 = arith.constant dense<0.000000e+00> : vector<1xf32>
    %49 = vector.multi_reduction <add>, %48, %cst_14 [1, 2] : vector<1x8x1xf32> to vector<1xf32>
    %50 = vector.shape_cast %49 : vector<1xf32> to vector<1x1x1xf32>
    %51 = vector.extract %50[0, 0, 0] : f32 from vector<1x1x1xf32>
    %52 = vector.broadcast %51 : f32 to vector<1x8x128xf32>
    %c0_15 = arith.constant 0 : index
    %c0_16 = arith.constant 0 : index
    %c0_17 = arith.constant 0 : index
    %53 = vector.load %arg3[%c0_15, %c0_16, %c0_17] : memref<1x8x128xf32, #tpu.memory_space<vmem>>, vector<1x8x128xf32>
    tpu.vector_store %arg3[%c0_15, %c0_16, %c0_17], %52 {strides = array<i32>} : memref<1x8x128xf32, #tpu.memory_space<vmem>>, vector<1x8x128xf32>,
    return
  }
  func.func @transform_0(%arg0: i32) -> (i32, i32) {
    %c0_i32 = arith.constant 0 : i32
    %c0_i32_0 = arith.constant 0 : i32
    return %arg0, %c0_i32 : i32, i32
  }
  func.func @transform_1(%arg0: i32) -> (i32, i32) {
    %c0_i32 = arith.constant 0 : i32
    %c0_i32_0 = arith.constant 0 : i32
    %c0_i32_1 = arith.constant 0 : i32
    return %c0_i32, %c0_i32_0 : i32, i32
  }
  func.func @transform_2(%arg0: i32) -> (i32, i32, i32) {
    %c0_i32 = arith.constant 0 : i32
    %c0_i32_0 = arith.constant 0 : i32
    %c0_i32_1 = arith.constant 0 : i32
    return %arg0, %c0_i32, %c0_i32_0 : i32, i32, i32
  }
}

</mosaic_0001>

<llo_original>
// kernel: tpu_custom_call.1
$region0: #{tpu_custom_call.1}
  #allocation0 [shape = 'u32[]', space=smem, size = 0x4, offset = 0x4, fixed_abs, tag = 'smem constant byte address 0x4 - core index']
  #allocation1 [shape = 'u32[72,128]{1,0:T(1,128)}', space=vmem, size = 0x9000, scoped, tag = 'internal scratch']
  %s0 = inlined_call_operand.hbm [shape: f32[8,128], index: 0, kind: input, shape index: {}]
  %s1 = inlined_call_operand.hbm [shape: f32[8,128], index: 1, kind: input, shape index: {}]
  %s2 = inlined_call_operand.hbm [shape: f32[1,8,128], index: 2, kind: output, shape index: {}]
  %s3 = sld [smem:[#allocation0]]
  $region26: #{tpu_custom_call.1} parent=0
    _
  %s5 = ssub.s32 1, %s3
  %s6 = scalar_select 0, %s5, %s3
  $region1: #{tpu_custom_call.1} parent=0
    #allocation2 [shape = 'u8[4096]{0}', space=vmem, size = 0x1000, scoped, tag = 'input window, operand 0, single buffered']
    #allocation3 [shape = 's32[1]{0}', space=sflag, size = 0x4, scoped, tag = 'scoped memory for tpu_custom_call.1']
    #allocation4 [shape = 's32[1]{0}', space=sflag, size = 0x4, scoped, tag = 'scoped memory for tpu_custom_call.1']
    #allocation5 [shape = 'u8[4096]{0}', space=vmem, size = 0x1000, scoped, tag = 'input window, operand 1, single buffered']
    #allocation6 [shape = 's32[1]{0}', space=sflag, size = 0x4, scoped, tag = 'scoped memory for tpu_custom_call.1']
    #allocation7 [shape = 'u8[4096]{0}', space=vmem, size = 0x1000, scoped, tag = 'output window, operand 0, single buffered']
    %7 = vsyncpa [#allocation3], 0
    %8 = vsyncpa [#allocation6], 0
    %9 = vsyncpa [#allocation4], 0
    // Predicated region
    $region2: #{tpu_custom_call.1} parent=1 // pred_check
      _
    $region3: #{tpu_custom_call.1} parent=1 // pred_check_branch
      %11 = sbr.rel (0) target = $region5
    $region4: #{tpu_custom_call.1} parent=1 // pred_region
      %13 = vsyncadd [#allocation3], 0
      %s15 = sshll.u32 %s0, 4
      %s16 = int_to_ptr.hbm [resolvable:$true] %s15
      %s17 = sshll.u32 [#allocation2], 4
      %s18 = int_to_ptr.vmem [resolvable:$true] %s17
      %20 = dma.hbm_to_vmem [thread:$0]  %s16, 128, %s18, [#allocation3]
    $region5: #{tpu_custom_call.1} parent=1 // pred_fallthru
      _
    // Predicated region
    $region6: #{tpu_custom_call.1} parent=1 // pred_check
      _
    $region7: #{tpu_custom_call.1} parent=1 // pred_check_branch
      %22 = sbr.rel (0) target = $region9
    $region8: #{tpu_custom_call.1} parent=1 // pred_region
      %24 = vsyncadd [#allocation6], 0
      %s26 = sshll.u32 %s1, 4
      %s27 = int_to_ptr.hbm [resolvable:$true] %s26
      %s28 = sshll.u32 [#allocation5], 4
      %s29 = int_to_ptr.vmem [resolvable:$true] %s28
      %31 = dma.hbm_to_vmem [thread:$0]  %s27, 128, %s29, [#allocation6]
    $region9: #{tpu_custom_call.1} parent=1 // pred_fallthru
      _
    // Predicated region
    $region10: #{tpu_custom_call.1} parent=1 // pred_check
      _
    $region11: #{tpu_custom_call.1} parent=1 // pred_check_branch
      %33 = sbr.rel (0) target = $region13
    $region12: #{tpu_custom_call.1} parent=1 // pred_region
      %35 = dma.done [#allocation3], 128
    $region13: #{tpu_custom_call.1} parent=1 // pred_fallthru
      _
    // Predicated region
    $region14: #{tpu_custom_call.1} parent=1 // pred_check
      _
    $region15: #{tpu_custom_call.1} parent=1 // pred_check_branch
      %37 = sbr.rel (0) target = $region17
    $region16: #{tpu_custom_call.1} parent=1 // pred_region
      %39 = dma.done [#allocation6], 128
    $region17: #{tpu_custom_call.1} parent=1 // pred_fallthru
      _
    %v41 = vld [vmem:[#allocation2] sm:$0xff]
    %v42 = vld [vmem:[#allocation5] sm:$0xff]
    %v43 = vmul.f32 %v41, %v41
    %44 = vadd.xlane.f32.xlu0 %v43
    %v45 = vpop.xlane.xlu0 %44
    %v46 = vmax.f32 %v45, 1e-24
    %v47 = vrsqrt.pop %v46
    %v48 = vmul.f32 %v47, %v46
    %v49 = vmul.f32 %v48, %v47
    %v50 = vmul.f32 0.5, %v49
    %v51 = vsub.f32 1.5, %v50
    %v52 = vmul.f32 %v47, %v51
    %vm53 = vweird.f32 %v46
    %vm54 = vweird.f32 %v47
    %vm55 = vmor %vm53, %vm54
    %v56 = vsel %vm55, %v47, %v52
    %v57 = vmul.f32 %v56, 10.0
    %v58 = vmul.f32 %v42, %v42
    %59 = vadd.xlane.f32.xlu0 %v58
    %v60 = vpop.xlane.xlu0 %59
    %v61 = vmax.f32 %v60, 1e-24
    %v62 = vrsqrt.pop %v61
    %v63 = vmul.f32 %v62, %v61
    %v64 = vmul.f32 %v63, %v62
    %v65 = vmul.f32 0.5, %v64
    %v66 = vsub.f32 1.5, %v65
    %v67 = vmul.f32 %v62, %v66
    %vm68 = vweird.f32 %v61
    %vm69 = vweird.f32 %v62
    %vm70 = vmor %vm68, %vm69
    %v71 = vsel %vm70, %v62, %v67
    %v72 = vmul.f32 %v41, %v57
    %v73 = vmul.f32 %v42, %v71
    %v74 = vpack.c.bf16 %v72, %v72
    %v75 = vpack.c.bf16 %v73, %v73
    %76 = vmatpush.bf16.xpose.msra.mxu0 0
    %77 = vmatpush.bf16.xpose.msra.mxu0 0
    %78 = vmatpush.bf16.xpose.msra.mxu0 0
    %79 = vmatpush.bf16.xpose.msra.mxu0 0
    %80 = vmatpush.bf16.xpose.msra.mxu0 0
    %81 = vmatpush.bf16.xpose.msra.mxu0 0
    %82 = vmatpush.bf16.xpose.msra.mxu0 0
    %83 = vmatpush.bf16.xpose.msra.mxu0 %v75
    %84 = vmatmul.bf16.gmra.mxu0 %v74
    %v85 = vpop.f32.mrf.mxu0
    %v86 = vadd.f32 0.0, %v85
    %v87 = vpop.f32.mrf.mxu0
    %88 = vdwg.mxu0
    %s89 = smul.u32 0, 8
    %s90 = scalar_lea.vmem [#allocation5], %s89
    %v91 = vld [vmem:[%s90] sm:$0xff]
    %v92 = vmul.f32 %v91, %v91
    %93 = vadd.xlane.f32.xlu0 %v92
    %v94 = vpop.xlane.xlu0 %93
    %v95 = vmax.f32 %v94, 1e-24
    %v96 = vrsqrt.pop %v95
    %v97 = vmul.f32 %v96, %v95
    %v98 = vmul.f32 %v97, %v96
    %v99 = vmul.f32 0.5, %v98
    %v100 = vsub.f32 1.5, %v99
    %v101 = vmul.f32 %v96, %v100
    %vm102 = vweird.f32 %v95
    %vm103 = vweird.f32 %v96
    %vm104 = vmor %vm102, %vm103
    %v105 = vsel %vm104, %v96, %v101
    %v106 = vmul.f32 %v91, %v105
    %v107 = vmul.f32 %v72, %v106
    %108 = vadd.xlane.f32.xlu0 %v107
    %v109 = vpop.xlane.xlu0 %108
    %vm110 = vcmask 64512
    %v111 = vsel %vm110, %v86, -inf
    %112 = vmax.xlane.f32.xlu0 %v111
    %v113 = vpop.xlane.xlu0 %112
    %v114 = vsub.f32 %v86, %v113
    %v115 = vmul.f32 %v114, 1.442695
    %v116 = vpow.pop %v115
    %v117 = vsel %vm110, %v116, 0.0
    %118 = vadd.xlane.f32.xlu0 %v117
    %v119 = vpop.xlane.xlu0 %118
    %v120 = vlog2.pop %v119
    %v121 = vmul.f32 %v120, 0.6931472
    %v122 = vadd.f32 %v113, %v121
    %v123 = vsub.f32 %v122, %v109
    %vm124 = vcmask 7168
    %v125 = vsel %vm124, %v123, 0.0
    %126 = vadd.xlane.f32.xlu0 %v125
    %v127 = vpop.xlane.xlu0 %126
    %v128 = vrot.slane %v127, 4
    %v129 = vadd.f32 %v127, %v128
    %v130 = vrot.slane %v129, 2
    %v131 = vadd.f32 %v129, %v130
    %v132 = vrot.slane %v131, 1
    %v133 = vadd.f32 %v131, %v132
    %s134 = vtos %v133
    %v135 = vstv %s134
    %136 = vst [vmem:[#allocation7] sm:$0xff] %v135
    // Predicated region
    $region18: #{tpu_custom_call.1} parent=1 // pred_check
      _
    $region19: #{tpu_custom_call.1} parent=1 // pred_check_branch
      %138 = sbr.rel (0) target = $region21
    $region20: #{tpu_custom_call.1} parent=1 // pred_region
      %140 = vsyncadd [#allocation4], 0
      %s142 = sshll.u32 [#allocation7], 4
      %s143 = int_to_ptr.vmem [resolvable:$true] %s142
      %s144 = sshll.u32 %s2, 4
      %s145 = int_to_ptr.hbm [resolvable:$true] %s144
      %147 = dma.vmem_to_hbm [thread:$0]  %s143, 128, %s145, [#allocation4]
    $region21: #{tpu_custom_call.1} parent=1 // pred_fallthru
      _
    // Predicated region
    $region22: #{tpu_custom_call.1} parent=1 // pred_check
      _
    $region23: #{tpu_custom_call.1} parent=1 // pred_check_branch
      %149 = sbr.rel (0) target = $region25
    $region24: #{tpu_custom_call.1} parent=1 // pred_region
      %151 = dma.done [#allocation4], 128
    $region25: #{tpu_custom_call.1} parent=1 // pred_fallthru
      _
    %152 = vsyncpa [#allocation3], 1
    %153 = vsyncpa [#allocation6], 1
    %154 = vsyncpa [#allocation4], 1

</llo_original>
